<compile_context>
chip_gen: v7x
topology: tpu7x:2x2x1
jax: 0.10.0
libtpu: 0.0.40
codegen_flags: <defaults>
</compile_context>

<pallas_src>
import functools

import numpy as np
import jax
import jax.numpy as jnp
from jax.experimental import pallas as pl
from jax.experimental.pallas import tpu as pltpu


def _bottleneck_kernel(x_ref, w1_ref, b1_ref, w2_ref, b2_ref, mask_ref, o_ref,
                       *, W, L):
    """One grid step = one channel-major, lane-packed slab of images.

    x_ref   : (1, Cp, L) f32   activations, lane axis = packed H*W pixels
    w1_ref  : (Cp, Cp)   bf16  BN-folded 1x1 conv weight
    b1_ref  : (Cp, 1)    f32   BN-folded bias 1
    w2_ref  : (Cp, 9*Cp) bf16  BN-folded 3x3 conv weight, taps fused into K
    b2_ref  : (Cp, 1)    f32   BN-folded bias 2
    mask_ref: (9, L)     f32   per-tap border-validity masks (precomputed)
    o_ref   : (1, Cp, L) f32
    """
    x = x_ref[0]                                            # (Cp, L) f32

    # ---- ConvBNSiLU #1: 1x1 conv == channel matmul (bf16 MXU, f32 acc) ----
    y1 = jnp.dot(w1_ref[...], x.astype(jnp.bfloat16),
                 preferred_element_type=jnp.float32)        # (Cp, L) f32
    y1 = y1 + b1_ref[...]
    y1 = y1 * jax.nn.sigmoid(y1)                            # SiLU in f32

    # ---- ConvBNSiLU #2: 3x3 conv, stride 1, pad 1 --------------------------
    # Nine shifted taps via XLU lane rotations + precomputed border masks,
    # stacked along the contraction axis -> a SINGLE K = 9*Cp matmul.
    masks = mask_ref[...]                                   # (9, L) f32
    taps = []
    for kh in range(3):
        for kw in range(3):
            delta = (kh - 1) * W + (kw - 1)                 # flat source offset
            if delta == 0:
                t = y1
            else:
                # t[c, i] = y1[c, (i + delta) mod L]   (XLU lane rotation)
                t = pltpu.roll(y1, shift=(-delta) % L, axis=1)
            k = kh * 3 + kw
            if k != 4:                                      # zero wrapped border
                t = t * masks[k:k + 1]
            taps.append(t)
    # Cp is a multiple of 8 -> sublane-aligned concatenation.
    stacked = jnp.concatenate(taps, axis=0)                 # (9*Cp, L) f32
    acc = jnp.dot(w2_ref[...], stacked.astype(jnp.bfloat16),
                  preferred_element_type=jnp.float32)       # (Cp, L) f32
    acc = acc + b2_ref[...]
    acc = acc * jax.nn.sigmoid(acc)                         # SiLU in f32

    # ---- residual add + lane-dense (unmasked) store -------------------------
    o_ref[0] = (x + acc).astype(o_ref.dtype)


def _make_tap_masks(H, W, images_per_block):
    """(9, images_per_block*H*W) f32 {0,1} masks: 1 iff the tap's source pixel
    is inside the same image (zeroes padded-border and cross-image wraps)."""
    HW = H * W
    row = np.tile(np.repeat(np.arange(H), W), images_per_block)
    col = np.tile(np.tile(np.arange(W), H), images_per_block)
    masks = np.ones((9, images_per_block * HW), np.float32)
    for kh in range(3):
        for kw in range(3):
            m = np.ones(images_per_block * HW, bool)
            if kh == 0:
                m &= row >= 1
            elif kh == 2:
                m &= row <= H - 2
            if kw == 0:
                m &= col >= 1
            elif kw == 2:
                m &= col <= W - 2
            masks[kh * 3 + kw] = m.astype(np.float32)
    return jnp.asarray(masks)


def bottleneck_pallas(x_nchw, w1f, b1f, w2f9, b2f, *, images_per_block=1):
    """BottleNeck forward.  x_nchw: (N, C, H, W) f32 -> (N, C, H, W) f32.

    w1f : (C, C)     BN-folded 1x1 weight (f32; cast to bf16 here)
    b1f : (C,)       BN-folded bias 1
    w2f9: (9, C, C)  BN-folded 3x3 weight, tap-major (kh*3+kw, out, in)
    b2f : (C,)       BN-folded bias 2
    """
    N, C, H, W = x_nchw.shape
    assert w1f.shape == (C, C) and w2f9.shape == (9, C, C)
    NB = images_per_block
    assert N % NB == 0, "batch size must be divisible by images_per_block"
    G = N // NB
    HW = H * W
    L = NB * HW
    assert L % 128 == 0, "packed lane count must be a multiple of 128"

    # Pad channels up to a multiple of 8 sublanes (aligned tap-stack concat,
    # no sub-tile weight blocks at tiny C).
    Cp = max(8, -(-C // 8) * 8)

    # ---- fold / pad / cast parameters (once, host side) --------------------
    w1p = jnp.zeros((Cp, Cp), jnp.float32).at[:C, :C].set(w1f)
    b1p = jnp.zeros((Cp, 1), jnp.float32).at[:C, 0].set(b1f)
    # Fused 3x3 weight: rows = out channel, cols = tap-major (k*Cp + in).
    w2p = jnp.zeros((Cp, 9, Cp), jnp.float32).at[:C, :, :C].set(
        jnp.transpose(w2f9, (1, 0, 2)))
    w2p = w2p.reshape(Cp, 9 * Cp)
    b2p = jnp.zeros((Cp, 1), jnp.float32).at[:C, 0].set(b2f)
    w1_bf = w1p.astype(jnp.bfloat16)
    w2_bf = w2p.astype(jnp.bfloat16)

    masks = _make_tap_masks(H, W, NB)                       # (9, L) f32

    # ---- activations: channel-major, NB images packed along the lane axis --
    xp = x_nchw
    if Cp != C:
        xp = jnp.pad(xp, ((0, 0), (0, Cp - C), (0, 0), (0, 0)))
    x_flat = (xp.reshape(G, NB, Cp, HW)
                .transpose(0, 2, 1, 3)
                .reshape(G, Cp, L))

    kernel = functools.partial(_bottleneck_kernel, W=W, L=L)

    # Scoped-VMEM sizing (default 16/32 MiB is far below physical).
    act = Cp * L * 4
    est = (4 * act                                  # x / out blocks, double-buffered
           + Cp * Cp * 2 + Cp * 9 * Cp * 2          # bf16 weights (single buffer)
           + 2 * Cp * 4 + 9 * L * 4                 # biases + masks
           + 9 * act + 9 * Cp * L * 2               # f32 tap stack + bf16 copy
           + 4 * act)                               # y1 / acc / temporaries
    vmem_limit = int(min(64 * 2 ** 20, max(32 * 2 ** 20, 2 * est)))

    const = dict(pipeline_mode=pl.Buffered(1))      # constants: single VMEM buffer

    out_flat = pl.pallas_call(
        kernel,
        out_shape=jax.ShapeDtypeStruct((G, Cp, L), x_flat.dtype),
        grid=(G,),
        in_specs=[
            pl.BlockSpec((1, Cp, L), lambda g: (g, 0, 0)),          # activations
            pl.BlockSpec((Cp, Cp), lambda g: (0, 0), **const),      # 1x1 W (bf16)
            pl.BlockSpec((Cp, 1), lambda g: (0, 0), **const),       # bias 1
            pl.BlockSpec((Cp, 9 * Cp), lambda g: (0, 0), **const),  # fused 3x3 W (bf16)
            pl.BlockSpec((Cp, 1), lambda g: (0, 0), **const),       # bias 2
            pl.BlockSpec((9, L), lambda g: (0, 0), **const),        # tap masks
        ],
        out_specs=pl.BlockSpec((1, Cp, L), lambda g: (g, 0, 0)),
        compiler_params=pltpu.CompilerParams(
            dimension_semantics=("parallel",),
            vmem_limit_bytes=vmem_limit),
    )(x_flat, w1_bf, b1p, w2_bf, b2p, masks)

    out = (out_flat.reshape(G, Cp, NB, HW)
                   .transpose(0, 2, 1, 3)
                   .reshape(N, Cp, H, W))
    return out[:, :C]


# --------------------------------------------------------------------------
# Deterministic parameter construction + BN folding (glue, plain JAX).
# --------------------------------------------------------------------------
def make_folded_params(key, c1, c2, eps=1e-5):
    ks = jax.random.split(key, 12)
    # Conv1: 1x1, PyTorch weight (c2, c1, 1, 1) + bias (c2,)
    w1 = jax.random.normal(ks[0], (c2, c1, 1, 1), jnp.float32) * 0.1
    bc1 = jax.random.normal(ks[1], (c2,), jnp.float32) * 0.1
    g1 = 1.0 + 0.1 * jax.random.normal(ks[2], (c2,), jnp.float32)
    beta1 = 0.1 * jax.random.normal(ks[3], (c2,), jnp.float32)
    mu1 = 0.1 * jax.random.normal(ks[4], (c2,), jnp.float32)
    var1 = jax.random.uniform(ks[5], (c2,), jnp.float32, 0.5, 1.5)
    # Conv2: 3x3, PyTorch weight (c2, c2, 3, 3) + bias (c2,)
    w2 = jax.random.normal(ks[6], (c2, c2, 3, 3), jnp.float32) * 0.1
    bc2 = jax.random.normal(ks[7], (c2,), jnp.float32) * 0.1
    g2 = 1.0 + 0.1 * jax.random.normal(ks[8], (c2,), jnp.float32)
    beta2 = 0.1 * jax.random.normal(ks[9], (c2,), jnp.float32)
    mu2 = 0.1 * jax.random.normal(ks[10], (c2,), jnp.float32)
    var2 = jax.random.uniform(ks[11], (c2,), jnp.float32, 0.5, 1.5)

    s1 = g1 / jnp.sqrt(var1 + eps)                        # (c2,)
    s2 = g2 / jnp.sqrt(var2 + eps)

    # Fold BN scale into weights, (conv bias - mean)*scale + beta into bias.
    w1f = w1[:, :, 0, 0] * s1[:, None]                    # (c2, c1)
    b1f = (bc1 - mu1) * s1 + beta1                        # (c2,)
    # (9, out, in), tap index = kh*3 + kw, BN scale folded per out channel.
    w2f9 = (jnp.transpose(w2, (2, 3, 0, 1)) * s2[None, None, :, None]
            ).reshape(9, c2, c2)
    b2f = (bc2 - mu2) * s2 + beta2                        # (c2,)

    raw = dict(w1=w1, bc1=bc1, g1=g1, beta1=beta1, mu1=mu1, var1=var1,
               w2=w2, bc2=bc2, g2=g2, beta2=beta2, mu2=mu2, var2=var2, eps=eps)
    return (w1f, b1f, w2f9, b2f), raw


def reference_bottleneck(x_nchw, raw):
    """Pure-JAX reference matching the PyTorch module in eval mode (f32)."""
    eps = raw["eps"]

    def conv_bn_silu(x, w, b, g, beta, mu, var, pad):
        y = jax.lax.conv_general_dilated(
            x, w, window_strides=(1, 1), padding=[(pad, pad), (pad, pad)],
            dimension_numbers=("NCHW", "OIHW", "NCHW"))
        y = y + b[None, :, None, None]
        y = (y - mu[None, :, None, None]) / jnp.sqrt(var + eps)[None, :, None, None]
        y = y * g[None, :, None, None] + beta[None, :, None, None]
        return y * jax.nn.sigmoid(y)

    y = conv_bn_silu(x_nchw, raw["w1"], raw["bc1"], raw["g1"], raw["beta1"],
                     raw["mu1"], raw["var1"], pad=0)
    y = conv_bn_silu(y, raw["w2"], raw["bc2"], raw["g2"], raw["beta2"],
                     raw["mu2"], raw["var2"], pad=1)
    return x_nchw + y


if __name__ == "__main__":
    key = jax.random.PRNGKey(0)
    k_x, k_p = jax.random.split(key)

    N, C, H, W = 2, 4, 16, 16                 # c1 == c2 == 4, H*W = 256 lanes
    x = jax.random.normal(k_x, (N, C, H, W), jnp.float32)

    (w1f, b1f, w2f9, b2f), raw = make_folded_params(k_p, C, C)

    # images_per_block=1 keeps two parallel grid steps (v7x dual TensorCores);
    # set >1 to pack several tiny images per step along the lane axis.
    out = bottleneck_pallas(x, w1f, b1f, w2f9, b2f, images_per_block=1)
    out = jax.block_until_ready(out)

    ref = reference_bottleneck(x, raw)
    assert out.shape == (N, C, H, W)
    max_err = float(jnp.max(jnp.abs(out - ref)))
    # bf16 MXU operands (f32 accumulation) -> loosened tolerance vs f32 ref.
    assert jnp.allclose(out, ref, atol=2e-2, rtol=2e-2), \
        f"mismatch vs reference (max abs err {max_err})"

    print("KERNEL_OK")
</pallas_src>

<mosaic_0001>
module attributes {stable_mosaic.version = 11 : i64} {
  func.func @_bottleneck_kernel(%arg0: i32, %arg1: memref<1x8x256xf32, #tpu.memory_space<vmem>>, %arg2: memref<8x8xbf16, #tpu.memory_space<vmem>>, %arg3: memref<8x1xf32, #tpu.memory_space<vmem>>, %arg4: memref<8x72xbf16, #tpu.memory_space<vmem>>, %arg5: memref<8x1xf32, #tpu.memory_space<vmem>>, %arg6: memref<9x256xf32, #tpu.memory_space<vmem>>, %arg7: memref<1x8x256xf32, #tpu.memory_space<vmem>>) attributes {dimension_semantics = [#tpu.dimension_semantics<parallel>], iteration_bounds = array<i64: 2>, scalar_prefetch = 0 : i64, scratch_operands = 0 : i64, tpu.core_type = #tpu.core_type<tc>, window_params = [{transform_indices = @transform_0, window_bounds = array<i64: 1, 8, 256>}, {pipeline_mode = #tpu.pipeline_mode<synchronous>, transform_indices = @transform_1, window_bounds = array<i64: 8, 8>}, {pipeline_mode = #tpu.pipeline_mode<synchronous>, transform_indices = @transform_2, window_bounds = array<i64: 8, 1>}, {pipeline_mode = #tpu.pipeline_mode<synchronous>, transform_indices = @transform_3, window_bounds = array<i64: 8, 72>}, {pipeline_mode = #tpu.pipeline_mode<synchronous>, transform_indices = @transform_4, window_bounds = array<i64: 8, 1>}, {pipeline_mode = #tpu.pipeline_mode<synchronous>, transform_indices = @transform_5, window_bounds = array<i64: 9, 256>}, {transform_indices = @transform_6, window_bounds = array<i64: 1, 8, 256>}]} {
    %c0 = arith.constant 0 : index
    %c0_0 = arith.constant 0 : index
    %c0_1 = arith.constant 0 : index
    %0 = vector.load %arg1[%c0, %c0_0, %c0_1] : memref<1x8x256xf32, #tpu.memory_space<vmem>>, vector<1x8x256xf32>
    %1 = vector.shape_cast %0 : vector<1x8x256xf32> to vector<8x256xf32>
    %c0_2 = arith.constant 0 : index
    %c0_3 = arith.constant 0 : index
    %2 = vector.load %arg2[%c0_2, %c0_3] : memref<8x8xbf16, #tpu.memory_space<vmem>>, vector<8x8xbf16>
    %3 = arith.truncf %1 : vector<8x256xf32> to vector<8x256xbf16>
    %cst = arith.constant dense<0.000000e+00> : vector<8x256xf32>
    %4 = tpu.matmul %2, %3, %cst {dimension_numbers = #tpu.dot_dimension_numbers<[1], [0], [0], [1], [0, 0, 1, 1], [], []>} : vector<8x8xbf16>, vector<8x256xbf16>, vector<8x256xf32> -> vector<8x256xf32>
    %c0_4 = arith.constant 0 : index
    %c0_5 = arith.constant 0 : index
    %5 = vector.load %arg3[%c0_4, %c0_5] : memref<8x1xf32, #tpu.memory_space<vmem>>, vector<8x1xf32>
    %6 = vector.broadcast %5 : vector<8x1xf32> to vector<8x256xf32>
    %7 = arith.addf %4, %6 : vector<8x256xf32>
    %8 = arith.negf %7 : vector<8x256xf32>
    %9 = math.exp %8 : vector<8x256xf32>
    %cst_6 = arith.constant 1.000000e+00 : f32
    %10 = vector.broadcast %cst_6 : f32 to vector<8x256xf32>
    %11 = arith.addf %10, %9 : vector<8x256xf32>
    %12 = arith.divf %10, %11 : vector<8x256xf32>
    %13 = arith.mulf %7, %12 : vector<8x256xf32>
    %c0_7 = arith.constant 0 : index
    %c0_8 = arith.constant 0 : index
    %14 = vector.load %arg6[%c0_7, %c0_8] : memref<9x256xf32, #tpu.memory_space<vmem>>, vector<9x256xf32>
    %c17_i32 = arith.constant 17 : i32
    %15 = tpu.dynamic_rotate %13 by %c17_i32 dim 1 : vector<8x256xf32>, i32 -> vector<8x256xf32>
    %16 = vector.extract_strided_slice %14 {offsets = [0, 0], sizes = [1, 256], strides = [1, 1]} : vector<9x256xf32> to vector<1x256xf32>
    %17 = vector.broadcast %16 : vector<1x256xf32> to vector<8x256xf32>
    %18 = arith.mulf %15, %17 : vector<8x256xf32>
    %c16_i32 = arith.constant 16 : i32
    %19 = tpu.dynamic_rotate %13 by %c16_i32 dim 1 : vector<8x256xf32>, i32 -> vector<8x256xf32>
    %20 = vector.extract_strided_slice %14 {offsets = [1, 0], sizes = [1, 256], strides = [1, 1]} : vector<9x256xf32> to vector<1x256xf32>
    %21 = vector.broadcast %20 : vector<1x256xf32> to vector<8x256xf32>
    %22 = arith.mulf %19, %21 : vector<8x256xf32>
    %c15_i32 = arith.constant 15 : i32
    %23 = tpu.dynamic_rotate %13 by %c15_i32 dim 1 : vector<8x256xf32>, i32 -> vector<8x256xf32>
    %24 = vector.extract_strided_slice %14 {offsets = [2, 0], sizes = [1, 256], strides = [1, 1]} : vector<9x256xf32> to vector<1x256xf32>
    %25 = vector.broadcast %24 : vector<1x256xf32> to vector<8x256xf32>
    %26 = arith.mulf %23, %25 : vector<8x256xf32>
    %c1_i32 = arith.constant 1 : i32
    %27 = tpu.dynamic_rotate %13 by %c1_i32 dim 1 : vector<8x256xf32>, i32 -> vector<8x256xf32>
    %28 = vector.extract_strided_slice %14 {offsets = [3, 0], sizes = [1, 256], strides = [1, 1]} : vector<9x256xf32> to vector<1x256xf32>
    %29 = vector.broadcast %28 : vector<1x256xf32> to vector<8x256xf32>
    %30 = arith.mulf %27, %29 : vector<8x256xf32>
    %c255_i32 = arith.constant 255 : i32
    %31 = tpu.dynamic_rotate %13 by %c255_i32 dim 1 : vector<8x256xf32>, i32 -> vector<8x256xf32>
    %32 = vector.extract_strided_slice %14 {offsets = [5, 0], sizes = [1, 256], strides = [1, 1]} : vector<9x256xf32> to vector<1x256xf32>
    %33 = vector.broadcast %32 : vector<1x256xf32> to vector<8x256xf32>
    %34 = arith.mulf %31, %33 : vector<8x256xf32>
    %c241_i32 = arith.constant 241 : i32
    %35 = tpu.dynamic_rotate %13 by %c241_i32 dim 1 : vector<8x256xf32>, i32 -> vector<8x256xf32>
    %36 = vector.extract_strided_slice %14 {offsets = [6, 0], sizes = [1, 256], strides = [1, 1]} : vector<9x256xf32> to vector<1x256xf32>
    %37 = vector.broadcast %36 : vector<1x256xf32> to vector<8x256xf32>
    %38 = arith.mulf %35, %37 : vector<8x256xf32>
    %c240_i32 = arith.constant 240 : i32
    %39 = tpu.dynamic_rotate %13 by %c240_i32 dim 1 : vector<8x256xf32>, i32 -> vector<8x256xf32>
    %40 = vector.extract_strided_slice %14 {offsets = [7, 0], sizes = [1, 256], strides = [1, 1]} : vector<9x256xf32> to vector<1x256xf32>
    %41 = vector.broadcast %40 : vector<1x256xf32> to vector<8x256xf32>
    %42 = arith.mulf %39, %41 : vector<8x256xf32>
    %c239_i32 = arith.constant 239 : i32
    %43 = tpu.dynamic_rotate %13 by %c239_i32 dim 1 : vector<8x256xf32>, i32 -> vector<8x256xf32>
    %44 = vector.extract_strided_slice %14 {offsets = [8, 0], sizes = [1, 256], strides = [1, 1]} : vector<9x256xf32> to vector<1x256xf32>
    %45 = vector.broadcast %44 : vector<1x256xf32> to vector<8x256xf32>
    %46 = arith.mulf %43, %45 : vector<8x256xf32>
    %47 = tpu.concatenate %18, %22, %26, %30, %13, %34, %38, %42, %46 in 0 : vector<8x256xf32>, vector<8x256xf32>, vector<8x256xf32>, vector<8x256xf32>, vector<8x256xf32>, vector<8x256xf32>, vector<8x256xf32>, vector<8x256xf32>, vector<8x256xf32> -> vector<72x256xf32>
    %c0_9 = arith.constant 0 : index
    %c0_10 = arith.constant 0 : index
    %48 = vector.load %arg4[%c0_9, %c0_10] : memref<8x72xbf16, #tpu.memory_space<vmem>>, vector<8x72xbf16>
    %49 = arith.truncf %47 : vector<72x256xf32> to vector<72x256xbf16>
    %cst_11 = arith.constant dense<0.000000e+00> : vector<8x256xf32>
    %50 = tpu.matmul %48, %49, %cst_11 {dimension_numbers = #tpu.dot_dimension_numbers<[1], [0], [0], [1], [0, 0, 1, 1], [], []>} : vector<8x72xbf16>, vector<72x256xbf16>, vector<8x256xf32> -> vector<8x256xf32>
    %c0_12 = arith.constant 0 : index
    %c0_13 = arith.constant 0 : index
    %51 = vector.load %arg5[%c0_12, %c0_13] : memref<8x1xf32, #tpu.memory_space<vmem>>, vector<8x1xf32>
    %52 = vector.broadcast %51 : vector<8x1xf32> to vector<8x256xf32>
    %53 = arith.addf %50, %52 : vector<8x256xf32>
    %54 = arith.negf %53 : vector<8x256xf32>
    %55 = math.exp %54 : vector<8x256xf32>
    %cst_14 = arith.constant 1.000000e+00 : f32
    %56 = vector.broadcast %cst_14 : f32 to vector<8x256xf32>
    %57 = arith.addf %56, %55 : vector<8x256xf32>
    %58 = arith.divf %56, %57 : vector<8x256xf32>
    %59 = arith.mulf %53, %58 : vector<8x256xf32>
    %60 = arith.addf %1, %59 : vector<8x256xf32>
    %c0_15 = arith.constant 0 : index
    %c0_16 = arith.constant 0 : index
    %c0_17 = arith.constant 0 : index
    %61 = vector.load %arg7[%c0_15, %c0_16, %c0_17] : memref<1x8x256xf32, #tpu.memory_space<vmem>>, vector<1x8x256xf32>
    %62 = vector.shape_cast %61 : vector<1x8x256xf32> to vector<8x256xf32>
    %63 = vector.shape_cast %60 : vector<8x256xf32> to vector<1x8x256xf32>
    tpu.vector_store %arg7[%c0_15, %c0_16, %c0_17], %63 {strides = array<i32>} : memref<1x8x256xf32, #tpu.memory_space<vmem>>, vector<1x8x256xf32>,
    return
  }
  func.func @transform_0(%arg0: i32) -> (i32, i32, i32) {
    %c0_i32 = arith.constant 0 : i32
    %c0_i32_0 = arith.constant 0 : i32
    %c0_i32_1 = arith.constant 0 : i32
    return %arg0, %c0_i32, %c0_i32_0 : i32, i32, i32
  }
  func.func @transform_1(%arg0: i32) -> (i32, i32) {
    %c0_i32 = arith.constant 0 : i32
    %c0_i32_0 = arith.constant 0 : i32
    %c0_i32_1 = arith.constant 0 : i32
    return %c0_i32, %c0_i32_0 : i32, i32
  }
  func.func @transform_2(%arg0: i32) -> (i32, i32) {
    %c0_i32 = arith.constant 0 : i32
    %c0_i32_0 = arith.constant 0 : i32
    %c0_i32_1 = arith.constant 0 : i32
    return %c0_i32, %c0_i32_0 : i32, i32
  }
  func.func @transform_3(%arg0: i32) -> (i32, i32) {
    %c0_i32 = arith.constant 0 : i32
    %c0_i32_0 = arith.constant 0 : i32
    %c0_i32_1 = arith.constant 0 : i32
    return %c0_i32, %c0_i32_0 : i32, i32
  }
  func.func @transform_4(%arg0: i32) -> (i32, i32) {
    %c0_i32 = arith.constant 0 : i32
    %c0_i32_0 = arith.constant 0 : i32
    %c0_i32_1 = arith.constant 0 : i32
    return %c0_i32, %c0_i32_0 : i32, i32
  }
  func.func @transform_5(%arg0: i32) -> (i32, i32) {
    %c0_i32 = arith.constant 0 : i32
    %c0_i32_0 = arith.constant 0 : i32
    %c0_i32_1 = arith.constant 0 : i32
    return %c0_i32, %c0_i32_0 : i32, i32
  }
  func.func @transform_6(%arg0: i32) -> (i32, i32, i32) {
    %c0_i32 = arith.constant 0 : i32
    %c0_i32_0 = arith.constant 0 : i32
    %c0_i32_1 = arith.constant 0 : i32
    return %arg0, %c0_i32, %c0_i32_0 : i32, i32, i32
  }
}

</mosaic_0001>

<llo_original>
// kernel: tpu_custom_call.1
$region0: #{tpu_custom_call.1}
  #allocation0 [shape = 'u32[]', space=smem, size = 0x4, offset = 0x4, fixed_abs, tag = 'smem constant byte address 0x4 - core index']
  #allocation1 [shape = 'u32[144,128]{1,0:T(1,128)}', space=vmem, size = 0x12000, scoped, tag = 'internal scratch']
  %s0 = inlined_call_operand.hbm [shape: f32[2,8,256], index: 0, kind: input, shape index: {}]
  %s1 = inlined_call_operand.vmem [shape: bf16[8,8], index: 1, kind: input, shape index: {}]
  %s2 = inlined_call_operand.vmem [shape: f32[8,1], index: 2, kind: input, shape index: {}]
  %s3 = inlined_call_operand.hbm [shape: bf16[8,72], index: 3, kind: input, shape index: {}]
  %s4 = inlined_call_operand.vmem [shape: f32[8,1], index: 4, kind: input, shape index: {}]
  %s5 = inlined_call_operand.vmem [shape: f32[9,256], index: 5, kind: input, shape index: {}]
  %s6 = inlined_call_operand.hbm [shape: f32[2,8,256], index: 6, kind: output, shape index: {}]
  %s7 = sld [smem:[#allocation0]]
  $region65: #{tpu_custom_call.1} parent=0
    _
  %s9 = ssub.s32 1, %s7
  %s10 = scalar_select 0, %s9, %s7
  $region1: #{tpu_custom_call.1} parent=0
    #allocation2 [shape = 'u8[16384]{0}', space=vmem, size = 0x4000, scoped, tag = 'input window, operand 0']
    #allocation3 [shape = 's32[2]{0}', space=sflag, size = 0x8, scoped, tag = 'scoped memory for tpu_custom_call.1']
    #allocation4 [shape = 's32[2]{0}', space=sflag, size = 0x8, scoped, tag = 'scoped memory for tpu_custom_call.1']
    #allocation5 [shape = 'u8[2048]{0}', space=vmem, size = 0x800, scoped, tag = 'input window, operand 3, single buffered']
    #allocation6 [shape = 's32[1]{0}', space=sflag, size = 0x4, scoped, tag = 'scoped memory for tpu_custom_call.1']
    #allocation7 [shape = 'u8[16384]{0}', space=vmem, size = 0x4000, scoped, tag = 'output window, operand 0']
    %11 = vsyncpa [#allocation3], 0
    %s12 = scalar_lea.sflag [#allocation3], 1
    %13 = vsyncpa %s12, 0
    %14 = vsyncpa [#allocation6], 0
    %15 = vsyncpa [#allocation4], 0
    %s16 = scalar_lea.sflag [#allocation4], 1
    %17 = vsyncpa %s16, 0
    loop: start=0, step=1, limit=4
    $region2: #{tpu_custom_call.1} parent=1 // loop_pre_header
      _
    $region3: #{tpu_custom_call.1} parent=1 // loop_header
      %s19 = sphi 0, %s23
      %p20 = scmp.ge.s32.totalorder %s19, 4
      %s29 = sphi 0, %s31
      %s32 = sphi 0, %s29
      %s33 = sphi 0, %s32
      %s49 = sphi 0, %s33
      %s53 = sphi 0, %s53
      %s55 = sphi 0, %s53
      %s56 = sphi 0, %s55
      %s70 = sphi 0, %s56
      %s74 = sphi 0, %s74
      %s76 = sphi 0, %s74
      %s77 = sphi 0, %s76
      %s91 = sphi 0, %s77
      %s95 = sphi 0, %s95
      %s97 = sphi 0, %s95
      %s98 = sphi 0, %s97
      %s112 = sphi 0, %s98
      %s116 = sphi 0, %s116
      %s118 = sphi 0, %s116
      %s119 = sphi 0, %s118
      %s133 = sphi 0, %s119
      %s137 = sphi 0, %s137
      %s139 = sphi 0, %s137
      %s140 = sphi 0, %s139
      %s154 = sphi 0, %s140
      %s160 = sphi 0, %s162
      %s163 = sphi 0, %s160
      %s164 = sphi 0, %s163
      %s180 = sphi 0, %s164
    $region4: #{tpu_custom_call.1} parent=1 // loop_header_branch
      %22 = sbr.rel (%p20) target = $region8
    $region5: #{tpu_custom_call.1} parent=1 // loop_body
      %s24 = ssub.s32 %s19, 1
      %s25 = ssub.s32 %s19, 2
      %s26 = sadd.s32 %s19, 1
      %s27 = ssub.s32 %s19, %s26
      %p28 = scmp.eq.s32.totalorder %s27, 0
      %s30 = sadd.s32 %s29, 1
      %s31 = scalar_select %p28, %s29, %s30
      %p34 = pneg %p28
      %p35 = scmp.eq.s32.totalorder %s19, 1
      %p36 = por %p34, %p35
      %p37 = scmp.ne.s32.totalorder %s29, %s32
      %p38 = scmp.eq.s32.totalorder %s19, 0
      %p39 = por %p37, %p38
      %p40 = scmp.ne.s32.totalorder %s29, %s32
      %p41 = scmp.eq.s32.totalorder %s24, 1
      %p42 = por %p40, %p41
      %p43 = scmp.ne.s32.totalorder %s32, %s33
      %p44 = scmp.eq.s32.totalorder %s24, 0
      %p45 = por %p43, %p44
      %p46 = scmp.ne.s32.totalorder %s32, %s33
      %p47 = scmp.eq.s32.totalorder %s25, 1
      %p48 = por %p46, %p47
      %p50 = scmp.ne.s32.totalorder %s33, %s49
      %p51 = scmp.eq.s32.totalorder %s25, 0
      %p52 = por %p50, %p51
      %s54 = sadd.s32 %s53, 1
      %p57 = scmp.eq.s32.totalorder %s19, 1
      %p58 = scmp.ne.s32.totalorder %s53, %s55
      %p59 = scmp.eq.s32.totalorder %s19, 0
      %p60 = por %p58, %p59
      %p61 = scmp.ne.s32.totalorder %s53, %s55
      %p62 = scmp.eq.s32.totalorder %s24, 1
      %p63 = por %p61, %p62
      %p64 = scmp.ne.s32.totalorder %s55, %s56
      %p65 = scmp.eq.s32.totalorder %s24, 0
      %p66 = por %p64, %p65
      %p67 = scmp.ne.s32.totalorder %s55, %s56
      %p68 = scmp.eq.s32.totalorder %s25, 1
      %p69 = por %p67, %p68
      %p71 = scmp.ne.s32.totalorder %s56, %s70
      %p72 = scmp.eq.s32.totalorder %s25, 0
      %p73 = por %p71, %p72
      %s75 = sadd.s32 %s74, 1
      %p78 = scmp.eq.s32.totalorder %s19, 1
      %p79 = scmp.ne.s32.totalorder %s74, %s76
      %p80 = scmp.eq.s32.totalorder %s19, 0
      %p81 = por %p79, %p80
      %p82 = scmp.ne.s32.totalorder %s74, %s76
      %p83 = scmp.eq.s32.totalorder %s24, 1
      %p84 = por %p82, %p83
      %p85 = scmp.ne.s32.totalorder %s76, %s77
      %p86 = scmp.eq.s32.totalorder %s24, 0
      %p87 = por %p85, %p86
      %p88 = scmp.ne.s32.totalorder %s76, %s77
      %p89 = scmp.eq.s32.totalorder %s25, 1
      %p90 = por %p88, %p89
      %p92 = scmp.ne.s32.totalorder %s77, %s91
      %p93 = scmp.eq.s32.totalorder %s25, 0
      %p94 = por %p92, %p93
      %s96 = sadd.s32 %s95, 1
      %p99 = scmp.eq.s32.totalorder %s19, 1
      %p100 = scmp.ne.s32.totalorder %s95, %s97
      %p101 = scmp.eq.s32.totalorder %s19, 0
      %p102 = por %p100, %p101
      %p103 = scmp.ne.s32.totalorder %s95, %s97
      %p104 = scmp.eq.s32.totalorder %s24, 1
      %p105 = por %p103, %p104
      %p106 = scmp.ne.s32.totalorder %s97, %s98
      %p107 = scmp.eq.s32.totalorder %s24, 0
      %p108 = por %p106, %p107
      %p109 = scmp.ne.s32.totalorder %s97, %s98
      %p110 = scmp.eq.s32.totalorder %s25, 1
      %p111 = por %p109, %p110
      %p113 = scmp.ne.s32.totalorder %s98, %s112
      %p114 = scmp.eq.s32.totalorder %s25, 0
      %p115 = por %p113, %p114
      %s117 = sadd.s32 %s116, 1
      %p120 = scmp.eq.s32.totalorder %s19, 1
      %p121 = scmp.ne.s32.totalorder %s116, %s118
      %p122 = scmp.eq.s32.totalorder %s19, 0
      %p123 = por %p121, %p122
      %p124 = scmp.ne.s32.totalorder %s116, %s118
      %p125 = scmp.eq.s32.totalorder %s24, 1
      %p126 = por %p124, %p125
      %p127 = scmp.ne.s32.totalorder %s118, %s119
      %p128 = scmp.eq.s32.totalorder %s24, 0
      %p129 = por %p127, %p128
      %p130 = scmp.ne.s32.totalorder %s118, %s119
      %p131 = scmp.eq.s32.totalorder %s25, 1
      %p132 = por %p130, %p131
      %p134 = scmp.ne.s32.totalorder %s119, %s133
      %p135 = scmp.eq.s32.totalorder %s25, 0
      %p136 = por %p134, %p135
      %s138 = sadd.s32 %s137, 1
      %p141 = scmp.eq.s32.totalorder %s19, 1
      %p142 = scmp.ne.s32.totalorder %s137, %s139
      %p143 = scmp.eq.s32.totalorder %s19, 0
      %p144 = por %p142, %p143
      %p145 = scmp.ne.s32.totalorder %s137, %s139
      %p146 = scmp.eq.s32.totalorder %s24, 1
      %p147 = por %p145, %p146
      %p148 = scmp.ne.s32.totalorder %s139, %s140
      %p149 = scmp.eq.s32.totalorder %s24, 0
      %p150 = por %p148, %p149
      %p151 = scmp.ne.s32.totalorder %s139, %s140
      %p152 = scmp.eq.s32.totalorder %s25, 1
      %p153 = por %p151, %p152
      %p155 = scmp.ne.s32.totalorder %s140, %s154
      %p156 = scmp.eq.s32.totalorder %s25, 0
      %p157 = por %p155, %p156
      %s158 = ssub.s32 %s19, %s26
      %p159 = scmp.eq.s32.totalorder %s158, 0
      %s161 = sadd.s32 %s160, 1
      %s162 = scalar_select %p159, %s160, %s161
      %p165 = pneg %p159
      %p166 = scmp.eq.s32.totalorder %s19, 1
      %p167 = por %p165, %p166
      %p168 = scmp.ne.s32.totalorder %s160, %s163
      %p169 = scmp.eq.s32.totalorder %s19, 0
      %p170 = por %p168, %p169
      %p171 = scmp.ne.s32.totalorder %s160, %s163
      %p172 = scmp.eq.s32.totalorder %s24, 1
      %p173 = por %p171, %p172
      %p174 = scmp.ne.s32.totalorder %s163, %s164
      %p175 = scmp.eq.s32.totalorder %s24, 0
      %p176 = por %p174, %p175
      %p177 = scmp.ne.s32.totalorder %s163, %s164
      %p178 = scmp.eq.s32.totalorder %s25, 1
      %p179 = por %p177, %p178
      %p181 = scmp.ne.s32.totalorder %s164, %s180
      %p182 = scmp.eq.s32.totalorder %s25, 0
      %p183 = por %p181, %p182
      %p184 = scmp.le.s32.totalorder 1, %s19
      %p185 = scmp.lt.s32.totalorder %s19, 3
      %p186 = pnand %p184, %p185
      %p187 = pneg %p186
      // Predicated region
      $region9: #{tpu_custom_call.1} parent=5 // pred_check
        _
      $region10: #{tpu_custom_call.1} parent=5 // pred_check_branch
        %189 = sbr.rel (%p186) target = $region12
      $region11: #{tpu_custom_call.1} parent=5 // pred_region
        %s190 = ssub.s32 %s19, 1
        // Predicated region
        $region13: #{tpu_custom_call.1} parent=11 // pred_check
          %p191 = pneg %p66
        $region14: #{tpu_custom_call.1} parent=11 // pred_check_branch
          %193 = sbr.rel (%p191) target = $region16
        $region15: #{tpu_custom_call.1} parent=11 // pred_region
          _
        $region16: #{tpu_custom_call.1} parent=11 // pred_fallthru
          _
        // Predicated region
        $region17: #{tpu_custom_call.1} parent=11 // pred_check
          %p194 = pneg %p87
        $region18: #{tpu_custom_call.1} parent=11 // pred_check_branch
          %196 = sbr.rel (%p194) target = $region20
        $region19: #{tpu_custom_call.1} parent=11 // pred_region
          _
        $region20: #{tpu_custom_call.1} parent=11 // pred_fallthru
          _
        // Predicated region
        $region21: #{tpu_custom_call.1} parent=11 // pred_check
          %p197 = pneg %p108
        $region22: #{tpu_custom_call.1} parent=11 // pred_check_branch
          %199 = sbr.rel (%p197) target = $region24
        $region23: #{tpu_custom_call.1} parent=11 // pred_region
          %s201 = ssub.s32 64, 64
          %202 = vsyncadd [#allocation6], %s201
          %s204 = sshll.u32 [#allocation5], 4
          %s205 = int_to_ptr.vmem [resolvable:$true] %s204
          %207 = dma.hbm_to_vmem [thread:$0]  %s3, 64, %s205, [#allocation6]
        $region24: #{tpu_custom_call.1} parent=11 // pred_fallthru
          _
        // Predicated region
        $region25: #{tpu_custom_call.1} parent=11 // pred_check
          %p208 = pneg %p129
        $region26: #{tpu_custom_call.1} parent=11 // pred_check_branch
          %210 = sbr.rel (%p208) target = $region28
        $region27: #{tpu_custom_call.1} parent=11 // pred_region
          _
        $region28: #{tpu_custom_call.1} parent=11 // pred_fallthru
          _
        // Predicated region
        $region29: #{tpu_custom_call.1} parent=11 // pred_check
          %p211 = pneg %p150
        $region30: #{tpu_custom_call.1} parent=11 // pred_check_branch
          %213 = sbr.rel (%p211) target = $region32
        $region31: #{tpu_custom_call.1} parent=11 // pred_region
          _
        $region32: #{tpu_custom_call.1} parent=11 // pred_fallthru
          _
      $region12: #{tpu_custom_call.1} parent=5 // pred_fallthru
        _
      %p214 = scmp.lt.s32.totalorder %s19, 2
      // Predicated region
      $region33: #{tpu_custom_call.1} parent=5 // pred_check
        %p215 = pneg %p214
      $region34: #{tpu_custom_call.1} parent=5 // pred_check_branch
        %217 = sbr.rel (%p215) target = $region36
      $region35: #{tpu_custom_call.1} parent=5 // pred_region
        // Predicated region
        $region37: #{tpu_custom_call.1} parent=35 // pred_check
          %p218 = pneg %p39
        $region38: #{tpu_custom_call.1} parent=35 // pred_check_branch
          %220 = sbr.rel (%p218) target = $region40
        $region39: #{tpu_custom_call.1} parent=35 // pred_region
          %s221 = sand.u32 %s29, 1
          %s222 = scalar_lea.sflag [#allocation3], %s221
          %s223 = sand.u32 %s29, 1
          %s224 = smul.addr %s223, 16
          %s225 = scalar_lea.vmem [#allocation2], %s224
          %s227 = ssub.s32 256, 256
          %228 = vsyncadd %s222, %s227
          %s229 = smul.addr %s19, 2
          %s230 = smul.addr %s229, 128
          %s231 = scalar_lea.hbm %s0, %s230
          %s233 = sshll.u32 %s225, 4
          %s234 = int_to_ptr.vmem [resolvable:$true] %s233
          %236 = dma.hbm_to_vmem [thread:$0]  %s231, 256, %s234, %s222
        $region40: #{tpu_custom_call.1} parent=35 // pred_fallthru
          _
      $region36: #{tpu_custom_call.1} parent=5 // pred_fallthru
        _
      %p237 = scmp.le.s32.totalorder 1, %s19
      %p238 = scmp.lt.s32.totalorder %s19, 3
      %p239 = pnand %p237, %p238
      %p240 = pneg %p239
      // Predicated region
      $region41: #{tpu_custom_call.1} parent=5 // pred_check
        _
      $region42: #{tpu_custom_call.1} parent=5 // pred_check_branch
        %242 = sbr.rel (%p239) target = $region44
      $region43: #{tpu_custom_call.1} parent=5 // pred_region
        %s243 = ssub.s32 %s19, 1
        %s244 = sand.u32 %s32, 1
        %s245 = scalar_lea.sflag [#allocation3], %s244
        %s246 = sand.u32 %s32, 1
        %s247 = smul.addr %s246, 16
        %s248 = scalar_lea.vmem [#allocation2], %s247
        // Predicated region
        $region45: #{tpu_custom_call.1} parent=43 // pred_check
          %p249 = pneg %p45
        $region46: #{tpu_custom_call.1} parent=43 // pred_check_branch
          %251 = sbr.rel (%p249) target = $region48
        $region47: #{tpu_custom_call.1} parent=43 // pred_region
          %252 = dma.done %s245, 256
        $region48: #{tpu_custom_call.1} parent=43 // pred_fallthru
          _
        // Predicated region
        $region49: #{tpu_custom_call.1} parent=43 // pred_check
          %p253 = pneg %p108
        $region50: #{tpu_custom_call.1} parent=43 // pred_check_branch
          %255 = sbr.rel (%p253) target = $region52
        $region51: #{tpu_custom_call.1} parent=43 // pred_region
          %256 = dma.done [#allocation6], 64
        $region52: #{tpu_custom_call.1} parent=43 // pred_fallthru
          _
        %s257 = sand.u32 %s32, 1
        %s258 = scalar_lea.sflag [#allocation3], %s257
        %s259 = sand.u32 %s32, 1
        %s260 = smul.addr %s259, 16
        %s261 = scalar_lea.vmem [#allocation2], %s260
        %p262 = pneg %p45
        %p263 = pneg %p42
        %p264 = pneg %p66
        %p265 = pneg %p63
        %p266 = pneg %p87
        %p267 = pneg %p84
        %p268 = pneg %p108
        %p269 = pneg %p105
        %p270 = pneg %p129
        %p271 = pneg %p126
        %p272 = pneg %p150
        %p273 = pneg %p147
        %p274 = pneg %p176
        %p275 = pneg %p173
        %s276 = sand.u32 %s163, 1
        %s277 = scalar_lea.sflag [#allocation4], %s276
        %s278 = sand.u32 %s163, 1
        %s279 = smul.addr %s278, 16
        %s280 = scalar_lea.vmem [#allocation7], %s279
        %v282 = vld [vmem:[%s248] sm:$0xff]
        %v283 = vld [vmem:[%s248 + $0x8] sm:$0xff]
        %v284 = vld [vmem:[%s1] sm:$0xf]
        %v285 = vpack.c.bf16 %v282, %v282
        %v286 = vpack.c.bf16 %v283, %v283
        %v287 = vld [vmem:[%s2] sm:$0xff]
        %289 = vset.pattern.permute.xlu0 0
        %290 = vperm.xlu0 %289, %v287
        %v291 = vpop.permute.xlu0 %290
        %vm293 = vcmask 64512
        %v295 = vsel %vm293, %v284, 0
        %vm297 = vcmask 1043456
        %v299 = vsel %vm297, %v285, 0
        %v302 = vsel %vm297, %v286, 0
        %304 = vmatprep.subr.bf16.mxu0 %v302
        %305 = vmatpush1.bf16.msra.mxu0 %v299
        %306 = vmatprep.subr.bf16.mxu0 0
        %307 = vmatpush1.bf16.msra.mxu0 0
        %308 = vmatprep.subr.bf16.mxu0 0
        %309 = vmatpush1.bf16.msra.mxu0 0
        %310 = vmatprep.subr.bf16.mxu0 0
        %311 = vmatpush1.bf16.msra.mxu0 0
        %312 = vmatprep.subr.bf16.mxu0 0
        %313 = vmatpush1.bf16.msra.mxu0 0
        %314 = vmatprep.subr.bf16.mxu0 0
        %315 = vmatpush1.bf16.msra.mxu0 0
        %316 = vmatprep.subr.bf16.mxu0 0
        %317 = vmatpush1.bf16.msra.mxu0 0
        %318 = vmatprep.subr.bf16.mxu0 0
        %319 = vmatpush1.bf16.msra.mxu0 0
        %320 = vmatprep.subr.bf16.mxu0 0
        %321 = vmatpush1.bf16.msra.mxu0 0
        %322 = vmatprep.subr.bf16.mxu0 0
        %323 = vmatpush1.bf16.msra.mxu0 0
        %324 = vmatprep.subr.bf16.mxu0 0
        %325 = vmatpush1.bf16.msra.mxu0 0
        %326 = vmatprep.subr.bf16.mxu0 0
        %327 = vmatpush1.bf16.msra.mxu0 0
        %328 = vmatprep.subr.bf16.mxu0 0
        %329 = vmatpush1.bf16.msra.mxu0 0
        %330 = vmatprep.subr.bf16.mxu0 0
        %331 = vmatpush1.bf16.msra.mxu0 0
        %332 = vmatprep.subr.bf16.mxu0 0
        %333 = vmatpush1.bf16.msra.mxu0 0
        %334 = vmatprep.subr.bf16.mxu0 0
        %335 = vmatpush1.bf16.msra.mxu0 0
        %336 = vmatprep.mubr.bf16.mxu0 0
        %337 = vmatmul.mubr.bf16.gmra.mrb[0].mxu0 %v295
        %v338 = vpop.f32.mrb[0].mxu0
        %v339 = vadd.f32 %v291, %v338
        %v340 = vpop.f32.mrb[0].mxu0
        %v341 = vadd.f32 %v291, %v340
        %v342 = vpop.f32.mrb[0].mxu0
        %v343 = vpop.f32.mrb[0].mxu0
        %344 = vdwg.mxu0
        %v345 = vxor.u32 %v339, 2147483648
        %v346 = vxor.u32 %v341, 2147483648
        %v347 = vmul.f32 %v345, 1.442695
        %v348 = vpow.pop %v347
        %v349 = vmul.f32 %v346, 1.442695
        %v350 = vpow.pop %v349
        %v351 = vadd.f32 %v348, 1.0
        %v352 = vadd.f32 %v350, 1.0
        %v353 = vrcp.pop %v351
        %v354 = vmul.f32 1.0, %v353
        %v355 = vrcp.pop %v352
        %v356 = vmul.f32 1.0, %v355
        %v357 = vmul.f32 %v339, %v354
        %v358 = vmul.f32 %v341, %v356
        %v359 = vld [vmem:[%s5] sm:$0xff]
        %v360 = vld [vmem:[%s5 + $0x8] sm:$0xff]
        %v361 = vld [vmem:[%s5 + $0x10] sm:$0x1]
        %v362 = vld [vmem:[%s5 + $0x18] sm:$0x1]
        %363 = vrot.lane.b32.xlu0 %v357, 17
        %v364 = vpop.permute.xlu0 %363
        %365 = vrot.lane.b32.xlu0 %v358, 17
        %v366 = vpop.permute.xlu0 %365
        %v367 = vlaneseq
        %v368 = vand.u32 %v367, 127
        %vm369 = vcmp.lt.s32.totalorder %v368, 17
        %v370 = vsel %vm369, %v364, %v366
        %v371 = vsel %vm369, %v366, %v364
        %v372 = vlaneseq
        %v373 = vshrl.u32 %v372, 7
        %v374 = vsub.s32 0, %v373
        %v375 = vrot.slane %v359, %v374
        %v376 = vlaneseq
        %v377 = vshrl.u32 %v376, 7
        %v378 = vsub.s32 0, %v377
        %v379 = vrot.slane %v360, %v378
        %v380 = vmul.f32 %v371, %v375
        %v381 = vmul.f32 %v370, %v379
        %382 = vrot.lane.b32.xlu0 %v357, 16
        %v383 = vpop.permute.xlu0 %382
        %384 = vrot.lane.b32.xlu0 %v358, 16
        %v385 = vpop.permute.xlu0 %384
        %vm386 = vcmp.lt.s32.totalorder %v368, 16
        %v387 = vsel %vm386, %v383, %v385
        %v388 = vsel %vm386, %v385, %v383
        %v389 = vlaneseq
        %v390 = vshrl.u32 %v389, 7
        %v391 = vsub.s32 1, %v390
        %v392 = vrot.slane %v359, %v391
        %v393 = vlaneseq
        %v394 = vshrl.u32 %v393, 7
        %v395 = vsub.s32 1, %v394
        %v396 = vrot.slane %v360, %v395
        %v397 = vmul.f32 %v388, %v392
        %v398 = vmul.f32 %v387, %v396
        %399 = vrot.lane.b32.xlu0 %v357, 15
        %v400 = vpop.permute.xlu0 %399
        %401 = vrot.lane.b32.xlu0 %v358, 15
        %v402 = vpop.permute.xlu0 %401
        %vm403 = vcmp.lt.s32.totalorder %v368, 15
        %v404 = vsel %vm403, %v400, %v402
        %v405 = vsel %vm403, %v402, %v400
        %v406 = vlaneseq
        %v407 = vshrl.u32 %v406, 7
        %v408 = vsub.s32 2, %v407
        %v409 = vrot.slane %v359, %v408
        %v410 = vlaneseq
        %v411 = vshrl.u32 %v410, 7
        %v412 = vsub.s32 2, %v411
        %v413 = vrot.slane %v360, %v412
        %v414 = vmul.f32 %v405, %v409
        %v415 = vmul.f32 %v404, %v413
        %416 = vrot.lane.b32.xlu0 %v357, 1
        %v417 = vpop.permute.xlu0 %416
        %418 = vrot.lane.b32.xlu0 %v358, 1
        %v419 = vpop.permute.xlu0 %418
        %vm420 = vcmp.lt.s32.totalorder %v368, 1
        %v421 = vsel %vm420, %v417, %v419
        %v422 = vsel %vm420, %v419, %v417
        %v423 = vlaneseq
        %v424 = vshrl.u32 %v423, 7
        %v425 = vsub.s32 3, %v424
        %v426 = vrot.slane %v359, %v425
        %v427 = vlaneseq
        %v428 = vshrl.u32 %v427, 7
        %v429 = vsub.s32 3, %v428
        %v430 = vrot.slane %v360, %v429
        %v431 = vmul.f32 %v422, %v426
        %v432 = vmul.f32 %v421, %v430
        %433 = vrot.lane.b32.xlu0 %v357, 127
        %v434 = vpop.permute.xlu0 %433
        %435 = vrot.lane.b32.xlu0 %v358, 127
        %v436 = vpop.permute.xlu0 %435
        %vm437 = vcmp.lt.s32.totalorder %v368, 127
        %v438 = vsel %vm437, %v434, %v436
        %v439 = vsel %vm437, %v436, %v434
        %v440 = vlaneseq
        %v441 = vshrl.u32 %v440, 7
        %v442 = vsub.s32 5, %v441
        %v443 = vrot.slane %v359, %v442
        %v444 = vlaneseq
        %v445 = vshrl.u32 %v444, 7
        %v446 = vsub.s32 5, %v445
        %v447 = vrot.slane %v360, %v446
        %v448 = vmul.f32 %v438, %v443
        %v449 = vmul.f32 %v439, %v447
        %450 = vrot.lane.b32.xlu0 %v357, 113
        %v451 = vpop.permute.xlu0 %450
        %452 = vrot.lane.b32.xlu0 %v358, 113
        %v453 = vpop.permute.xlu0 %452
        %vm454 = vcmp.lt.s32.totalorder %v368, 113
        %v455 = vsel %vm454, %v451, %v453
        %v456 = vsel %vm454, %v453, %v451
        %v457 = vlaneseq
        %v458 = vshrl.u32 %v457, 7
        %v459 = vsub.s32 6, %v458
        %v460 = vrot.slane %v359, %v459
        %v461 = vlaneseq
        %v462 = vshrl.u32 %v461, 7
        %v463 = vsub.s32 6, %v462
        %v464 = vrot.slane %v360, %v463
        %v465 = vmul.f32 %v455, %v460
        %v466 = vmul.f32 %v456, %v464
        %467 = vrot.lane.b32.xlu0 %v357, 112
        %v468 = vpop.permute.xlu0 %467
        %469 = vrot.lane.b32.xlu0 %v358, 112
        %v470 = vpop.permute.xlu0 %469
        %vm471 = vcmp.lt.s32.totalorder %v368, 112
        %v472 = vsel %vm471, %v468, %v470
        %v473 = vsel %vm471, %v470, %v468
        %v474 = vlaneseq
        %v475 = vshrl.u32 %v474, 7
        %v476 = vsub.s32 7, %v475
        %v477 = vrot.slane %v359, %v476
        %v478 = vlaneseq
        %v479 = vshrl.u32 %v478, 7
        %v480 = vsub.s32 7, %v479
        %v481 = vrot.slane %v360, %v480
        %v482 = vmul.f32 %v472, %v477
        %v483 = vmul.f32 %v473, %v481
        %484 = vrot.lane.b32.xlu0 %v357, 111
        %v485 = vpop.permute.xlu0 %484
        %486 = vrot.lane.b32.xlu0 %v358, 111
        %v487 = vpop.permute.xlu0 %486
        %vm488 = vcmp.lt.s32.totalorder %v368, 111
        %v489 = vsel %vm488, %v485, %v487
        %v490 = vsel %vm488, %v487, %v485
        %v491 = vlaneseq
        %v492 = vshrl.u32 %v491, 7
        %v493 = vsub.s32 0, %v492
        %v494 = vrot.slane %v361, %v493
        %v495 = vlaneseq
        %v496 = vshrl.u32 %v495, 7
        %v497 = vsub.s32 0, %v496
        %v498 = vrot.slane %v362, %v497
        %v499 = vmul.f32 %v489, %v494
        %v500 = vmul.f32 %v490, %v498
        %v501 = vld [vmem:[#allocation5] sm:$0xf]
        %v502 = vpack.c.bf16 %v397, %v380
        %v503 = vpack.c.bf16 %v398, %v381
        %v504 = vpack.c.bf16 %v431, %v414
        %v505 = vpack.c.bf16 %v432, %v415
        %v506 = vpack.c.bf16 %v448, %v357
        %v507 = vpack.c.bf16 %v449, %v358
        %v508 = vpack.c.bf16 %v482, %v465
        %v509 = vpack.c.bf16 %v483, %v466
        %v510 = vpack.c.bf16 %v499, %v499
        %v511 = vpack.c.bf16 %v500, %v500
        %v512 = vld [vmem:[%s4] sm:$0xff]
        %514 = vset.pattern.permute.xlu0 0
        %515 = vperm.xlu0 %514, %v512
        %v516 = vpop.permute.xlu0 %515
        %vm518 = vcmask 588800
        %v520 = vsel %vm518, %v501, 0
        %v523 = vsel %vm297, %v510, 0
        %v526 = vsel %vm297, %v511, 0
        %528 = vmatprep.subr.bf16.mxu0 %v503
        %529 = vmatpush1.bf16.msra.mxu0 %v502
        %530 = vmatprep.subr.bf16.mxu0 %v505
        %531 = vmatpush1.bf16.msra.mxu0 %v504
        %532 = vmatprep.subr.bf16.mxu0 %v507
        %533 = vmatpush1.bf16.msra.mxu0 %v506
        %534 = vmatprep.subr.bf16.mxu0 %v509
        %535 = vmatpush1.bf16.msra.mxu0 %v508
        %536 = vmatprep.subr.bf16.mxu0 %v526
        %537 = vmatpush1.bf16.msra.mxu0 %v523
        %538 = vmatprep.subr.bf16.mxu0 0
        %539 = vmatpush1.bf16.msra.mxu0 0
        %540 = vmatprep.subr.bf16.mxu0 0
        %541 = vmatpush1.bf16.msra.mxu0 0
        %542 = vmatprep.subr.bf16.mxu0 0
        %543 = vmatpush1.bf16.msra.mxu0 0
        %544 = vmatprep.subr.bf16.mxu0 0
        %545 = vmatpush1.bf16.msra.mxu0 0
        %546 = vmatprep.subr.bf16.mxu0 0
        %547 = vmatpush1.bf16.msra.mxu0 0
        %548 = vmatprep.subr.bf16.mxu0 0
        %549 = vmatpush1.bf16.msra.mxu0 0
        %550 = vmatprep.subr.bf16.mxu0 0
        %551 = vmatpush1.bf16.msra.mxu0 0
        %552 = vmatprep.subr.bf16.mxu0 0
        %553 = vmatpush1.bf16.msra.mxu0 0
        %554 = vmatprep.subr.bf16.mxu0 0
        %555 = vmatpush1.bf16.msra.mxu0 0
        %556 = vmatprep.subr.bf16.mxu0 0
        %557 = vmatpush1.bf16.msra.mxu0 0
        %558 = vmatprep.subr.bf16.mxu0 0
        %559 = vmatpush1.bf16.msra.mxu0 0
        %560 = vmatprep.mubr.bf16.mxu0 0
        %561 = vmatmul.mubr.bf16.gmra.mrb[0].mxu0 %v520
        %v562 = vpop.f32.mrb[0].mxu0
        %v563 = vadd.f32 %v516, %v562
        %v564 = vpop.f32.mrb[0].mxu0
        %v565 = vadd.f32 %v516, %v564
        %v566 = vpop.f32.mrb[0].mxu0
        %v567 = vpop.f32.mrb[0].mxu0
        %568 = vdwg.mxu0
        %v569 = vxor.u32 %v563, 2147483648
        %v570 = vxor.u32 %v565, 2147483648
        %v571 = vmul.f32 %v569, 1.442695
        %v572 = vpow.pop %v571
        %v573 = vmul.f32 %v570, 1.442695
        %v574 = vpow.pop %v573
        %v575 = vadd.f32 %v572, 1.0
        %v576 = vadd.f32 %v574, 1.0
        %v577 = vrcp.pop %v575
        %v578 = vmul.f32 1.0, %v577
        %v579 = vrcp.pop %v576
        %v580 = vmul.f32 1.0, %v579
        %v581 = vmul.f32 %v563, %v578
        %v582 = vmul.f32 %v565, %v580
        %v583 = vadd.f32 %v282, %v581
        %v584 = vadd.f32 %v283, %v582
        %585 = vst [vmem:[%s280] sm:$0xff] %v583
        %586 = vst [vmem:[%s280 + $0x8] sm:$0xff] %v584
        %s587 = sand.u32 %s163, 1
        %s588 = scalar_lea.sflag [#allocation4], %s587
        %s589 = sand.u32 %s163, 1
        %s590 = smul.addr %s589, 16
        %s591 = scalar_lea.vmem [#allocation7], %s590
        // Predicated region
        $region53: #{tpu_custom_call.1} parent=43 // pred_check
          %p592 = pneg %p173
        $region54: #{tpu_custom_call.1} parent=43 // pred_check_branch
          %594 = sbr.rel (%p592) target = $region56
        $region55: #{tpu_custom_call.1} parent=43 // pred_region
          %s596 = ssub.s32 256, 256
          %597 = vsyncadd %s588, %s596
          %s598 = smul.addr %s24, 2
          %s599 = smul.addr %s598, 128
          %s600 = scalar_lea.hbm %s6, %s599
          %s602 = sshll.u32 %s591, 4
          %s603 = int_to_ptr.vmem [resolvable:$true] %s602
          %605 = dma.vmem_to_hbm [thread:$0]  %s603, 256, %s600, %s588
        $region56: #{tpu_custom_call.1} parent=43 // pred_fallthru
          _
      $region44: #{tpu_custom_call.1} parent=5 // pred_fallthru
        _
      %p606 = scmp.le.s32.totalorder 2, %s19
      // Predicated region
      $region57: #{tpu_custom_call.1} parent=5 // pred_check
        %p607 = pneg %p606
      $region58: #{tpu_custom_call.1} parent=5 // pred_check_branch
        %609 = sbr.rel (%p607) target = $region60
      $region59: #{tpu_custom_call.1} parent=5 // pred_region
        %s610 = ssub.s32 %s19, 2
        // Predicated region
        $region61: #{tpu_custom_call.1} parent=59 // pred_check
          %p611 = pneg %p179
        $region62: #{tpu_custom_call.1} parent=59 // pred_check_branch
          %613 = sbr.rel (%p611) target = $region64
        $region63: #{tpu_custom_call.1} parent=59 // pred_region
          %s614 = sand.u32 %s164, 1
          %s615 = scalar_lea.sflag [#allocation4], %s614
          %s616 = sand.u32 %s164, 1
          %s617 = smul.addr %s616, 16
          %s618 = scalar_lea.vmem [#allocation7], %s617
          %619 = dma.done %s615, 256
        $region64: #{tpu_custom_call.1} parent=59 // pred_fallthru
          _
      $region60: #{tpu_custom_call.1} parent=5 // pred_fallthru
        _
    $region6: #{tpu_custom_call.1} parent=1 // loop_footer
      %s23 = sadd.s32 1, %s19
    $region7: #{tpu_custom_call.1} parent=1 // loop_footer_branch
      %18 = sbr.rel target = $region3
    $region8: #{tpu_custom_call.1} parent=1 // loop_exit
      _
    %620 = vsyncpa [#allocation3], 1
    %s621 = scalar_lea.sflag [#allocation3], 1
    %622 = vsyncpa %s621, 1
    %623 = vsyncpa [#allocation6], 1
    %624 = vsyncpa [#allocation4], 1
    %s625 = scalar_lea.sflag [#allocation4], 1
    %626 = vsyncpa %s625, 1

</llo_original>
